<compile_context>
chip_gen: v7x
topology: tpu7x:2x2x1
jax: 0.10.0
libtpu: 0.0.40
codegen_flags: <defaults>
</compile_context>

<pallas_src>
import functools
import math

import jax
import jax.numpy as jnp
from jax import lax
from jax.experimental import pallas as pl
from jax.experimental.pallas import tpu as pltpu

SMOOTH = 1e-08
LANES = 128
MAX_BLOCK_ROWS = 8192   # (8192,128) f32 = 4 MiB; x2 inputs x2 buffers = 16 MiB VMEM
SUBLANE_ALIGN = 32      # satisfies f32 (8), bf16 (16) and int8/bool (32) sublane tiling


def _sigmoid_f32(x):
    # Single EUP transcendental (tanh) instead of exp + divide.
    x = x.astype(jnp.float32)
    return 0.5 * jnp.tanh(0.5 * x) + 0.5


def _dice_partial_kernel(p_ref, t_ref, out_ref, *, block_rows, valid_rows_last):
    def compute(valid_rows):
        p = _sigmoid_f32(p_ref[...])
        t = t_ref[...].astype(jnp.float32)
        if valid_rows is not None:
            # Only the final grid block can contain unspecified (possibly NaN)
            # padded rows; zero them with a where-select so garbage never
            # reaches the sums.  `valid_rows` is a small static Python int
            # (<= block_rows), so this compare can never overflow int32
            # regardless of the total element count.
            row = lax.broadcasted_iota(jnp.int32, (block_rows, LANES), 0)
            keep = row < valid_rows
            p = jnp.where(keep, p, 0.0)
            t = jnp.where(keep, t, 0.0)
        # Lane-wise partial sums for this block, packed into one (3,128) block.
        out_ref[0:1, :] = jnp.sum(p * t, axis=0, keepdims=True)
        out_ref[1:2, :] = jnp.sum(p, axis=0, keepdims=True)
        out_ref[2:3, :] = jnp.sum(t, axis=0, keepdims=True)

    if valid_rows_last == block_rows:
        compute(None)                        # no partial block anywhere
    else:
        is_last = pl.program_id(0) == pl.num_programs(0) - 1

        @pl.when(jnp.logical_not(is_last))
        def _():
            compute(None)                    # unmasked fast path

        @pl.when(is_last)
        def _():
            compute(valid_rows_last)         # masked path, last block only


def dice_loss(prediction, target, smooth=SMOOTH, max_block_rows=MAX_BLOCK_ROWS):
    assert prediction.shape == target.shape
    n = math.prod(prediction.shape) if prediction.shape else 1

    # Contiguous reshape: metadata only, no HBM copy.
    pred_flat = prediction.reshape(-1)
    targ_flat = target.reshape(-1)

    rows = n // LANES
    n_main = rows * LANES
    tail = n - n_main

    inter_sum = jnp.float32(0.0)
    pred_sum = jnp.float32(0.0)
    targ_sum = jnp.float32(0.0)

    if tail:
        # Ragged tail (< 128 elements): tiny plain-JAX reduction instead of a
        # full-array jnp.pad copy.
        p_tail = _sigmoid_f32(pred_flat[n_main:])
        t_tail = targ_flat[n_main:].astype(jnp.float32)
        inter_sum += jnp.sum(p_tail * t_tail)
        pred_sum += jnp.sum(p_tail)
        targ_sum += jnp.sum(t_tail)

    if rows > 0:
        # Lane-dense (rows, 128) view of the aligned prefix.  Copy-free when
        # n is a multiple of 128.
        # TODO(synk): on the ragged path XLA may materialize the prefix slice;
        # going fully copy-free there needs a manual pl.ANY + make_async_copy path.
        pred_main = pred_flat if tail == 0 else pred_flat[:n_main]
        targ_main = targ_flat if tail == 0 else targ_flat[:n_main]
        pred2d = pred_main.reshape(rows, LANES)
        targ2d = targ_main.reshape(rows, LANES)

        if rows <= 2 * SUBLANE_ALIGN:
            block_rows = rows            # block == full array dim -> always legal
            grid = 1
        else:
            # Split into >= 2 blocks so both v7x TensorCores get work; cap the
            # block at max_block_rows so very large arrays get many steps and
            # the double-buffer pipeline hides its prologue/epilogue.
            half = -(-rows // 2)
            block_rows = min(max_block_rows,
                             -(-half // SUBLANE_ALIGN) * SUBLANE_ALIGN)
            grid = -(-rows // block_rows)
        valid_rows_last = rows - (grid - 1) * block_rows

        kernel = functools.partial(
            _dice_partial_kernel,
            block_rows=block_rows,
            valid_rows_last=valid_rows_last)

        in_bytes_per_row = LANES * (pred2d.dtype.itemsize + targ2d.dtype.itemsize)
        vmem_limit = max(32 << 20,                                   # > v5e 16 MiB default
                         2 * block_rows * in_bytes_per_row + (8 << 20))

        parts = pl.pallas_call(
            kernel,
            out_shape=jax.ShapeDtypeStruct((grid, 3, LANES), jnp.float32),
            grid_spec=pltpu.PrefetchScalarGridSpec(
                num_scalar_prefetch=0,
                grid=(grid,),
                in_specs=[
                    pl.BlockSpec((block_rows, LANES), lambda i: (i, 0)),
                    pl.BlockSpec((block_rows, LANES), lambda i: (i, 0)),
                ],
                out_specs=pl.BlockSpec((None, 3, LANES), lambda i: (i, 0, 0)),
            ),
            compiler_params=pltpu.CompilerParams(
                dimension_semantics=("parallel",),    # megacore sharding on v7x
                vmem_limit_bytes=int(vmem_limit)),
        )(pred2d, targ2d)

        inter_sum += jnp.sum(parts[:, 0, :])
        pred_sum += jnp.sum(parts[:, 1, :])
        targ_sum += jnp.sum(parts[:, 2, :])

    intersection = 2.0 * inter_sum + smooth
    union = pred_sum + targ_sum + smooth
    return 1.0 - intersection / union


def dice_loss_ref(prediction, target, smooth=SMOOTH):
    p = jax.nn.sigmoid(prediction.astype(jnp.float32))
    t = target.astype(jnp.float32)
    intersection = 2.0 * jnp.sum(p * t) + smooth
    union = jnp.sum(p) + jnp.sum(t) + smooth
    return 1.0 - intersection / union


if __name__ == "__main__":
    key = jax.random.PRNGKey(0)
    k1, k2, k3, k4, k5 = jax.random.split(key, 5)

    # Main case: NCHW f32 inputs (same convention as the PyTorch module),
    # element count is a multiple of 128 -> fully copy-free fast path.
    pred = jax.random.normal(k1, (2, 4, 16, 16), dtype=jnp.float32)
    targ = (jax.random.uniform(k2, (2, 4, 16, 16)) > 0.5).astype(jnp.float32)
    loss = jax.block_until_ready(dice_loss(pred, targ))
    ref = jax.block_until_ready(dice_loss_ref(pred, targ))
    assert jnp.allclose(loss, ref, atol=1e-5, rtol=1e-5), (loss, ref)

    # Ragged case: 2*3*40*67 = 16080 elements -> 125 aligned rows + 80-element
    # tail; exercises the JAX tail path, grid=2 and the pl.when-gated row mask.
    pred2 = jax.random.normal(k3, (2, 3, 40, 67), dtype=jnp.float32)
    targ2 = (jax.random.uniform(k4, (2, 3, 40, 67)) > 0.5).astype(jnp.float32)
    loss2 = jax.block_until_ready(dice_loss(pred2, targ2))
    ref2 = jax.block_until_ready(dice_loss_ref(pred2, targ2))
    assert jnp.allclose(loss2, ref2, atol=1e-5, rtol=1e-5), (loss2, ref2)

    # Narrow-input case: bf16 predictions stay bf16 in HBM (half the bytes);
    # the in-kernel astype(f32) does the widening.
    pred3 = jax.random.normal(k5, (2, 4, 16, 16), dtype=jnp.bfloat16)
    targ3 = (jax.random.uniform(k2, (2, 4, 16, 16)) > 0.5).astype(jnp.float32)
    loss3 = jax.block_until_ready(dice_loss(pred3, targ3))
    ref3 = jax.block_until_ready(dice_loss_ref(pred3, targ3))
    assert jnp.allclose(loss3, ref3, atol=1e-5, rtol=1e-5), (loss3, ref3)

    print("KERNEL_OK")
</pallas_src>

<mosaic_0001>
module attributes {stable_mosaic.version = 11 : i64} {
  func.func @_dice_partial_kernel(%arg0: i32, %arg1: memref<16x128xf32, #tpu.memory_space<vmem>>, %arg2: memref<16x128xf32, #tpu.memory_space<vmem>>, %arg3: memref<1x3x128xf32, #tpu.memory_space<vmem>>) attributes {dimension_semantics = [#tpu.dimension_semantics<parallel>], iteration_bounds = array<i64: 1>, scalar_prefetch = 0 : i64, scratch_operands = 0 : i64, tpu.core_type = #tpu.core_type<tc>, window_params = [{transform_indices = @transform_0, window_bounds = array<i64: 16, 128>}, {transform_indices = @transform_1, window_bounds = array<i64: 16, 128>}, {transform_indices = @transform_2, window_bounds = array<i64: 1, 3, 128>}]} {
    %c0 = arith.constant 0 : index
    %c0_0 = arith.constant 0 : index
    %0 = vector.load %arg1[%c0, %c0_0] : memref<16x128xf32, #tpu.memory_space<vmem>>, vector<16x128xf32>
    %cst = arith.constant 5.000000e-01 : f32
    %1 = vector.broadcast %cst : f32 to vector<16x128xf32>
    %2 = arith.mulf %1, %0 : vector<16x128xf32>
    %3 = math.tanh %2 : vector<16x128xf32>
    %cst_1 = arith.constant 5.000000e-01 : f32
    %4 = vector.broadcast %cst_1 : f32 to vector<16x128xf32>
    %5 = arith.mulf %4, %3 : vector<16x128xf32>
    %cst_2 = arith.constant 5.000000e-01 : f32
    %6 = vector.broadcast %cst_2 : f32 to vector<16x128xf32>
    %7 = arith.addf %5, %6 : vector<16x128xf32>
    %c0_3 = arith.constant 0 : index
    %c0_4 = arith.constant 0 : index
    %8 = vector.load %arg2[%c0_3, %c0_4] : memref<16x128xf32, #tpu.memory_space<vmem>>, vector<16x128xf32>
    %9 = arith.mulf %7, %8 : vector<16x128xf32>
    %cst_5 = arith.constant dense<0.000000e+00> : vector<128xf32>
    %10 = vector.multi_reduction <add>, %9, %cst_5 [0] : vector<16x128xf32> to vector<128xf32>
    %11 = vector.shape_cast %10 : vector<128xf32> to vector<1x128xf32>
    %c0_6 = arith.constant 0 : index
    %c0_7 = arith.constant 0 : index
    %c0_8 = arith.constant 0 : index
    %12 = vector.load %arg3[%c0_6, %c0_7, %c0_8] : memref<1x3x128xf32, #tpu.memory_space<vmem>>, vector<1x1x128xf32>
    %13 = vector.shape_cast %12 : vector<1x1x128xf32> to vector<1x128xf32>
    %14 = vector.shape_cast %11 : vector<1x128xf32> to vector<1x1x128xf32>
    tpu.vector_store %arg3[%c0_6, %c0_7, %c0_8], %14 {strides = array<i32>} : memref<1x3x128xf32, #tpu.memory_space<vmem>>, vector<1x1x128xf32>,
    %cst_9 = arith.constant dense<0.000000e+00> : vector<128xf32>
    %15 = vector.multi_reduction <add>, %7, %cst_9 [0] : vector<16x128xf32> to vector<128xf32>
    %16 = vector.shape_cast %15 : vector<128xf32> to vector<1x128xf32>
    %c0_10 = arith.constant 0 : index
    %c1 = arith.constant 1 : index
    %c0_11 = arith.constant 0 : index
    %17 = vector.load %arg3[%c0_10, %c1, %c0_11] : memref<1x3x128xf32, #tpu.memory_space<vmem>>, vector<1x1x128xf32>
    %18 = vector.shape_cast %17 : vector<1x1x128xf32> to vector<1x128xf32>
    %19 = vector.shape_cast %16 : vector<1x128xf32> to vector<1x1x128xf32>
    tpu.vector_store %arg3[%c0_10, %c1, %c0_11], %19 {strides = array<i32>} : memref<1x3x128xf32, #tpu.memory_space<vmem>>, vector<1x1x128xf32>,
    %cst_12 = arith.constant dense<0.000000e+00> : vector<128xf32>
    %20 = vector.multi_reduction <add>, %8, %cst_12 [0] : vector<16x128xf32> to vector<128xf32>
    %21 = vector.shape_cast %20 : vector<128xf32> to vector<1x128xf32>
    %c0_13 = arith.constant 0 : index
    %c2 = arith.constant 2 : index
    %c0_14 = arith.constant 0 : index
    %22 = vector.load %arg3[%c0_13, %c2, %c0_14] : memref<1x3x128xf32, #tpu.memory_space<vmem>>, vector<1x1x128xf32>
    %23 = vector.shape_cast %22 : vector<1x1x128xf32> to vector<1x128xf32>
    %24 = vector.shape_cast %21 : vector<1x128xf32> to vector<1x1x128xf32>
    tpu.vector_store %arg3[%c0_13, %c2, %c0_14], %24 {strides = array<i32>} : memref<1x3x128xf32, #tpu.memory_space<vmem>>, vector<1x1x128xf32>,
    return
  }
  func.func @transform_0(%arg0: i32) -> (i32, i32) {
    %c0_i32 = arith.constant 0 : i32
    %c0_i32_0 = arith.constant 0 : i32
    return %arg0, %c0_i32 : i32, i32
  }
  func.func @transform_1(%arg0: i32) -> (i32, i32) {
    %c0_i32 = arith.constant 0 : i32
    %c0_i32_0 = arith.constant 0 : i32
    return %arg0, %c0_i32 : i32, i32
  }
  func.func @transform_2(%arg0: i32) -> (i32, i32, i32) {
    %c0_i32 = arith.constant 0 : i32
    %c0_i32_0 = arith.constant 0 : i32
    %c0_i32_1 = arith.constant 0 : i32
    return %arg0, %c0_i32, %c0_i32_0 : i32, i32, i32
  }
}

</mosaic_0001>

<llo_original>
// kernel: tpu_custom_call.1
$region0: #{tpu_custom_call.1}
  #allocation0 [shape = 'u32[]', space=smem, size = 0x4, offset = 0x4, fixed_abs, tag = 'smem constant byte address 0x4 - core index']
  #allocation1 [shape = 'u32[144,128]{1,0:T(1,128)}', space=vmem, size = 0x12000, scoped, tag = 'internal scratch']
  %s0 = inlined_call_operand.hbm [shape: f32[16,128], index: 0, kind: input, shape index: {}]
  %s1 = inlined_call_operand.hbm [shape: f32[16,128], index: 1, kind: input, shape index: {}]
  %s2 = inlined_call_operand.vmem [shape: f32[1,3,128], index: 2, kind: output, shape index: {}]
  %s3 = sld [smem:[#allocation0]]
  $region26: #{tpu_custom_call.1} parent=0
    _
  %s5 = ssub.s32 1, %s3
  %s6 = scalar_select 0, %s5, %s3
  $region1: #{tpu_custom_call.1} parent=0
    #allocation2 [shape = 'u8[8192]{0}', space=vmem, size = 0x2000, scoped, tag = 'input window, operand 0, single buffered']
    #allocation3 [shape = 's32[1]{0}', space=sflag, size = 0x4, scoped, tag = 'scoped memory for tpu_custom_call.1']
    #allocation4 [shape = 'u8[8192]{0}', space=vmem, size = 0x2000, scoped, tag = 'input window, operand 1, single buffered']
    #allocation5 [shape = 's32[1]{0}', space=sflag, size = 0x4, scoped, tag = 'scoped memory for tpu_custom_call.1']
    %7 = vsyncpa [#allocation3], 0
    %8 = vsyncpa [#allocation5], 0
    // Predicated region
    $region2: #{tpu_custom_call.1} parent=1 // pred_check
      _
    $region3: #{tpu_custom_call.1} parent=1 // pred_check_branch
      %10 = sbr.rel (0) target = $region5
    $region4: #{tpu_custom_call.1} parent=1 // pred_region
      %s12 = ssub.s32 256, 256
      %13 = vsyncadd [#allocation3], %s12
      %s14 = sshll.u32 [#allocation2], 4
      %s15 = int_to_ptr.vmem [resolvable:$true] %s14
      %20 = dma.hbm_to_vmem [thread:$0]  %s0, 256, %s15, [#allocation3], 128, 128, 8
    $region5: #{tpu_custom_call.1} parent=1 // pred_fallthru
      _
    // Predicated region
    $region6: #{tpu_custom_call.1} parent=1 // pred_check
      _
    $region7: #{tpu_custom_call.1} parent=1 // pred_check_branch
      %22 = sbr.rel (0) target = $region9
    $region8: #{tpu_custom_call.1} parent=1 // pred_region
      %s24 = ssub.s32 256, 256
      %25 = vsyncadd [#allocation5], %s24
      %s26 = sshll.u32 [#allocation4], 4
      %s27 = int_to_ptr.vmem [resolvable:$true] %s26
      %32 = dma.hbm_to_vmem [thread:$0]  %s1, 256, %s27, [#allocation5], 128, 128, 8
    $region9: #{tpu_custom_call.1} parent=1 // pred_fallthru
      _
    // Predicated region
    $region10: #{tpu_custom_call.1} parent=1 // pred_check
      _
    $region11: #{tpu_custom_call.1} parent=1 // pred_check_branch
      %34 = sbr.rel (0) target = $region13
    $region12: #{tpu_custom_call.1} parent=1 // pred_region
      %35 = dma.done [#allocation3], 256
    $region13: #{tpu_custom_call.1} parent=1 // pred_fallthru
      _
    // Predicated region
    $region14: #{tpu_custom_call.1} parent=1 // pred_check
      _
    $region15: #{tpu_custom_call.1} parent=1 // pred_check_branch
      %37 = sbr.rel (0) target = $region17
    $region16: #{tpu_custom_call.1} parent=1 // pred_region
      %38 = dma.done [#allocation5], 256
    $region17: #{tpu_custom_call.1} parent=1 // pred_fallthru
      _
    %v39 = vld [vmem:[#allocation2] sm:$0xff]
    %v40 = vld [vmem:[#allocation2 + $0x8] sm:$0xff]
    %v41 = vmul.f32 %v39, 0.5
    %v42 = vmul.f32 %v40, 0.5
    %v43 = vtanh.pop %v41
    %v44 = vtanh.pop %v42
    %v45 = vmul.f32 %v43, 0.5
    %v46 = vmul.f32 %v44, 0.5
    %v47 = vadd.f32 %v45, 0.5
    %v48 = vadd.f32 %v46, 0.5
    %v49 = vld [vmem:[#allocation4] sm:$0xff]
    %v50 = vld [vmem:[#allocation4 + $0x8] sm:$0xff]
    %v51 = vmul.f32 %v47, %v49
    %v52 = vmul.f32 %v48, %v50
    %v53 = vadd.f32 %v51, %v52
    %v54 = vrot.slane %v53, 4
    %v55 = vadd.f32 %v53, %v54
    %v56 = vrot.slane %v55, 2
    %v57 = vadd.f32 %v55, %v56
    %v58 = vrot.slane %v57, 1
    %v59 = vadd.f32 %v57, %v58
    %60 = vst [vmem:[%s2] sm:$0x1] %v59
    %v61 = vadd.f32 %v47, %v48
    %v62 = vrot.slane %v61, 4
    %v63 = vadd.f32 %v61, %v62
    %v64 = vrot.slane %v63, 2
    %v65 = vadd.f32 %v63, %v64
    %v66 = vrot.slane %v65, 1
    %v67 = vadd.f32 %v65, %v66
    %68 = vst [vmem:[%s2 + $0x1] sm:$0x1] %v67
    %v69 = vadd.f32 %v49, %v50
    %v70 = vrot.slane %v69, 4
    %v71 = vadd.f32 %v69, %v70
    %v72 = vrot.slane %v71, 2
    %v73 = vadd.f32 %v71, %v72
    %v74 = vrot.slane %v73, 1
    %v75 = vadd.f32 %v73, %v74
    %76 = vst [vmem:[%s2 + $0x2] sm:$0x1] %v75
    // Predicated region
    $region18: #{tpu_custom_call.1} parent=1 // pred_check
      _
    $region19: #{tpu_custom_call.1} parent=1 // pred_check_branch
      %78 = sbr.rel (0) target = $region21
    $region20: #{tpu_custom_call.1} parent=1 // pred_region
      _
    $region21: #{tpu_custom_call.1} parent=1 // pred_fallthru
      _
    // Predicated region
    $region22: #{tpu_custom_call.1} parent=1 // pred_check
      _
    $region23: #{tpu_custom_call.1} parent=1 // pred_check_branch
      %80 = sbr.rel (0) target = $region25
    $region24: #{tpu_custom_call.1} parent=1 // pred_region
      _
    $region25: #{tpu_custom_call.1} parent=1 // pred_fallthru
      _
    %81 = vsyncpa [#allocation3], 1
    %82 = vsyncpa [#allocation5], 1

</llo_original>
